<compile_context>
chip_gen: v7x
topology: tpu7x:2x2x1
jax: 0.10.0
libtpu: 0.0.40
codegen_flags: <defaults>
</compile_context>

<pallas_src>
import functools

import jax
import jax.numpy as jnp
from jax.experimental import pallas as pl
from jax.experimental.pallas import tpu as pltpu


# Scoped-VMEM limit for every pallas_call: lifts v5e's 16 MiB default so the
# 512-lane double-buffered blocks (plus the widest layer's Gram scratch) fit,
# while staying under v7x's 64 MiB physical VMEM with headroom.
_VMEM_LIMIT = 48 * 1024 * 1024


def _round_up(x, m):
    return (x + m - 1) // m * m


def _choose_tiling(n):
    """Lane tiling along the point axis N.

    512-lane tiles sit at >=85% of the HBM roofline on v5e/v6e/v7x and amortize
    the ~0.35us per-grid-step overhead; N is padded to a multiple of the tile so
    awkward N never falls back to 128/256-wide tiles.  Small N collapses to a
    single lane-aligned tile instead of padding all the way to 512.
    """
    target = 512
    n128 = _round_up(n, 128)
    if n128 <= target:
        return n128, n128
    return target, _round_up(n, target)


# ---------------------------------------------------------------------------
# Folded-BN finalize (tiny plain-JAX math between kernels)
# ---------------------------------------------------------------------------
def _fold_bn(w, gamma, beta, s_parts, gram_parts, m, eps):
    """Fold train-mode BN into per-channel (scale, shift) for y = W @ x.

    s_parts: (B, Cin, 1) per-batch partial sums of this layer's input.
    gram_parts: (B, Cin, Cin) per-batch partial Grams of this layer's input.
    mean(y) = W mean(x) (+bias, which cancels), var(y) = diag(W Cov(x) W^T).
    """
    s = jnp.sum(s_parts, axis=0)          # (Cin, 1)
    gram = jnp.sum(gram_parts, axis=0)    # (Cin, Cin)
    w32 = w.astype(jnp.float32)
    inv_m = 1.0 / m
    mean_x = s * inv_m
    # Biased covariance of the layer input (matches training-mode BatchNorm1d).
    cov = gram * inv_m - mean_x * mean_x.T
    wm = jnp.matmul(w32, mean_x, precision=jax.lax.Precision.HIGHEST)   # (Cout,1)
    wc = jnp.matmul(w32, cov, precision=jax.lax.Precision.HIGHEST)      # (Cout,Cin)
    var_y = jnp.maximum(jnp.sum(wc * w32, axis=1, keepdims=True), 0.0)
    scale = gamma * jax.lax.rsqrt(var_y + eps)
    # Conv bias cancels against the batch-mean subtraction, so it never appears.
    shift = beta - wm * scale
    return scale, shift


# ---------------------------------------------------------------------------
# Layer-0 statistics: input moments only (never materializes W @ x)
# ---------------------------------------------------------------------------
def _input_stats_kernel(x_ref, s_out_ref, g_out_ref, s_acc, g_acc):
    j = pl.program_id(1)
    last_j = pl.num_programs(1) - 1

    @pl.when(j == 0)
    def _():
        s_acc[...] = jnp.zeros_like(s_acc)
        g_acc[...] = jnp.zeros_like(g_acc)

    x = x_ref[0].astype(jnp.float32)                       # (Cin, tile_n)
    # Padded point columns are zero, so they add nothing to either moment.
    s_acc[...] += jnp.sum(x, axis=1, keepdims=True)
    g_acc[...] += jax.lax.dot_general(x, x, (((1,), (1,)), ((), ())),
                                      preferred_element_type=jnp.float32)

    @pl.when(j == last_j)
    def _():
        s_out_ref[0] = s_acc[...]
        g_out_ref[0] = g_acc[...]


def _input_stats(x, *, tile_n):
    B, cin, n_pad = x.shape
    grid = (B, n_pad // tile_n)
    return pl.pallas_call(
        _input_stats_kernel,
        out_shape=(jax.ShapeDtypeStruct((B, cin, 1), jnp.float32),
                   jax.ShapeDtypeStruct((B, cin, cin), jnp.float32)),
        grid=grid,
        in_specs=[pl.BlockSpec((1, cin, tile_n), lambda b, j: (b, 0, j))],
        out_specs=(pl.BlockSpec((1, cin, 1), lambda b, j: (b, 0, 0)),
                   pl.BlockSpec((1, cin, cin), lambda b, j: (b, 0, 0))),
        scratch_shapes=[pltpu.VMEM((cin, 1), jnp.float32),
                        pltpu.VMEM((cin, cin), jnp.float32)],
        compiler_params=pltpu.CompilerParams(
            dimension_semantics=("parallel", "arbitrary"),
            vmem_limit_bytes=_VMEM_LIMIT),
    )(x)


# ---------------------------------------------------------------------------
# Fused layer: matmul + folded-BN + ReLU + next-layer statistics
# ---------------------------------------------------------------------------
def _fused_apply_kernel(x_ref, w_ref, scale_ref, shift_ref,
                        o_ref, s_out_ref, g_out_ref,
                        s_acc, g_acc,
                        *, n_true, tile_n, has_pad, compute_dtype):
    j = pl.program_id(1)
    last_j = pl.num_programs(1) - 1

    @pl.when(j == 0)
    def _():
        s_acc[...] = jnp.zeros_like(s_acc)
        g_acc[...] = jnp.zeros_like(g_acc)

    x = x_ref[0].astype(compute_dtype)                     # (Cin, tile_n)
    y = jnp.dot(w_ref[...], x, preferred_element_type=jnp.float32)
    out = jnp.maximum(y * scale_ref[...] + shift_ref[...], 0.0)

    out_store = out.astype(o_ref.dtype)
    o_ref[0] = out_store                                   # unmasked, lane-dense

    def accumulate(v):
        # Next layer's raw batch statistics: per-channel sum + Gram (MXU).
        s_acc[...] += jnp.sum(v, axis=1, keepdims=True)
        g_acc[...] += jax.lax.dot_general(v, v, (((1,), (1,)), ((), ())),
                                          preferred_element_type=jnp.float32)

    stat = out_store.astype(jnp.float32)   # exactly what the next layer reads
    if has_pad:
        # Padded point columns live only in the last N-tile; gate the mask there
        # so interior tiles pay no VPU masking cost.  Stored pad columns may be
        # non-zero but never reach any statistic or the final (sliced) output.
        @pl.when(j == last_j)
        def _():
            col = jax.lax.broadcasted_iota(jnp.int32, stat.shape, 1) + j * tile_n
            accumulate(jnp.where(col < n_true, stat, 0.0))

        @pl.when(j != last_j)
        def _():
            accumulate(stat)
    else:
        accumulate(stat)

    @pl.when(j == last_j)
    def _():
        s_out_ref[0] = s_acc[...]
        g_out_ref[0] = g_acc[...]


def _apply_fused(x, w, scale, shift, *, tile_n, n_true, out_dtype, compute_dtype):
    B, cin, n_pad = x.shape
    cout = w.shape[0]
    grid = (B, n_pad // tile_n)
    kernel = functools.partial(_fused_apply_kernel, n_true=n_true, tile_n=tile_n,
                               has_pad=(n_pad != n_true),
                               compute_dtype=compute_dtype)
    return pl.pallas_call(
        kernel,
        out_shape=(jax.ShapeDtypeStruct((B, cout, n_pad), out_dtype),
                   jax.ShapeDtypeStruct((B, cout, 1), jnp.float32),
                   jax.ShapeDtypeStruct((B, cout, cout), jnp.float32)),
        grid=grid,
        in_specs=[
            pl.BlockSpec((1, cin, tile_n), lambda b, j: (b, 0, j)),
            pl.BlockSpec((cout, cin), lambda b, j: (0, 0)),
            pl.BlockSpec((cout, 1), lambda b, j: (0, 0)),
            pl.BlockSpec((cout, 1), lambda b, j: (0, 0)),
        ],
        out_specs=(
            pl.BlockSpec((1, cout, tile_n), lambda b, j: (b, 0, j)),
            pl.BlockSpec((1, cout, 1), lambda b, j: (b, 0, 0)),
            pl.BlockSpec((1, cout, cout), lambda b, j: (b, 0, 0)),
        ),
        scratch_shapes=[pltpu.VMEM((cout, 1), jnp.float32),
                        pltpu.VMEM((cout, cout), jnp.float32)],
        compiler_params=pltpu.CompilerParams(
            dimension_semantics=("parallel", "arbitrary"),
            vmem_limit_bytes=_VMEM_LIMIT),
    )(x, w, scale, shift)


# ---------------------------------------------------------------------------
# Last layer: matmul + folded-BN + ReLU only (no stats, no mask — output is
# sliced back to N afterwards).  Fully parallel grid.
# ---------------------------------------------------------------------------
def _last_apply_kernel(x_ref, w_ref, scale_ref, shift_ref, o_ref, *, compute_dtype):
    x = x_ref[0].astype(compute_dtype)
    y = jnp.dot(w_ref[...], x, preferred_element_type=jnp.float32)
    o_ref[0] = jnp.maximum(y * scale_ref[...] + shift_ref[...], 0.0).astype(o_ref.dtype)


def _apply_last(x, w, scale, shift, *, tile_n, out_dtype, compute_dtype):
    B, cin, n_pad = x.shape
    cout = w.shape[0]
    grid = (B, n_pad // tile_n)
    kernel = functools.partial(_last_apply_kernel, compute_dtype=compute_dtype)
    return pl.pallas_call(
        kernel,
        out_shape=jax.ShapeDtypeStruct((B, cout, n_pad), out_dtype),
        grid=grid,
        in_specs=[
            pl.BlockSpec((1, cin, tile_n), lambda b, j: (b, 0, j)),
            pl.BlockSpec((cout, cin), lambda b, j: (0, 0)),
            pl.BlockSpec((cout, 1), lambda b, j: (0, 0)),
            pl.BlockSpec((cout, 1), lambda b, j: (0, 0)),
        ],
        out_specs=pl.BlockSpec((1, cout, tile_n), lambda b, j: (b, 0, j)),
        compiler_params=pltpu.CompilerParams(
            dimension_semantics=("parallel", "parallel"),
            vmem_limit_bytes=_VMEM_LIMIT),
    )(x, w, scale, shift)


# ---------------------------------------------------------------------------
# Fully VMEM-resident fast path: the whole network in ONE pallas_call
# (no inter-layer HBM round trips, no extra kernel launches).
# ---------------------------------------------------------------------------
def _resident_kernel(*refs, num_layers, n_true, eps, compute_dtype, has_pad):
    x_ref = refs[0]
    o_ref = refs[-1]
    batch = x_ref.shape[0]
    inv_m = 1.0 / float(batch * n_true)

    hs = [x_ref[b].astype(compute_dtype) for b in range(batch)]   # (C, n_pad) each
    for li in range(num_layers):
        w_ref, gamma_ref, beta_ref = refs[1 + 3 * li: 4 + 3 * li]
        w = w_ref[...]
        ys = [jnp.dot(w, h, preferred_element_type=jnp.float32) for h in hs]
        # Padded columns of h are zero (no bias added) -> contribute nothing.
        s = sum(jnp.sum(y, axis=1, keepdims=True) for y in ys)
        sq = sum(jnp.sum(y * y, axis=1, keepdims=True) for y in ys)
        mean = s * inv_m
        var = jnp.maximum(sq * inv_m - mean * mean, 0.0)
        scale = gamma_ref[...] * jax.lax.rsqrt(var + eps)
        shift = beta_ref[...] - mean * scale
        last = li == num_layers - 1
        new_hs = []
        for b, y in enumerate(ys):
            out = jnp.maximum(y * scale + shift, 0.0)
            if last:
                o_ref[b] = out.astype(o_ref.dtype)
            else:
                if has_pad:
                    # Keep padded columns at zero so later statistics stay clean.
                    col = jax.lax.broadcasted_iota(jnp.int32, out.shape, 1)
                    out = jnp.where(col < n_true, out, 0.0)
                new_hs.append(out.astype(compute_dtype))
        hs = new_hs


def _resident_forward(params, x, *, n_true, eps, compute_dtype, out_dtype):
    B, _, n_pad = x.shape
    num_layers = len(params)
    cout_last = int(params[-1]["w"].shape[0])
    args = [x]
    for p in params:
        args.append(p["w"].astype(compute_dtype))
        args.append(p["gamma"].reshape(-1, 1).astype(jnp.float32))
        args.append(p["beta"].reshape(-1, 1).astype(jnp.float32))
    kernel = functools.partial(_resident_kernel, num_layers=num_layers,
                               n_true=n_true, eps=eps,
                               compute_dtype=compute_dtype,
                               has_pad=(n_pad != n_true))
    return pl.pallas_call(
        kernel,
        out_shape=jax.ShapeDtypeStruct((B, cout_last, n_pad), out_dtype),
        compiler_params=pltpu.CompilerParams(vmem_limit_bytes=_VMEM_LIMIT),
    )(*args)


def _fits_resident(params, B, c_in, n_pad):
    c_max = max([int(c_in)] + [int(p["w"].shape[0]) for p in params])
    act_bytes = B * c_max * n_pad * 4                 # f32 upper bound
    w_bytes = sum(int(p["w"].size) * 4 for p in params)
    # Conservative so the intermediates fit even on v7x's 64 MiB VMEM.
    return B <= 8 and (3 * act_bytes + w_bytes) <= 6 * 1024 * 1024


# ---------------------------------------------------------------------------
# Streaming (tiled, pipelined) path
# ---------------------------------------------------------------------------
def _streaming_forward(params, h, *, n_true, tile_n, eps, compute_dtype, out_dtype):
    B = h.shape[0]
    m = float(B * n_true)
    n_layers = len(params)

    # Layer-0 folded BN from the input's first/second moments.
    s, g = _input_stats(h, tile_n=tile_n)
    scale, shift = _fold_bn(params[0]["w"],
                            params[0]["gamma"].reshape(-1, 1),
                            params[0]["beta"].reshape(-1, 1), s, g, m, eps)

    for li, layer in enumerate(params):
        w = layer["w"].astype(compute_dtype)
        if li + 1 < n_layers:
            h, s, g = _apply_fused(h, w, scale, shift, tile_n=tile_n,
                                   n_true=n_true, out_dtype=compute_dtype,
                                   compute_dtype=compute_dtype)
            nxt = params[li + 1]
            scale, shift = _fold_bn(nxt["w"], nxt["gamma"].reshape(-1, 1),
                                    nxt["beta"].reshape(-1, 1), s, g, m, eps)
        else:
            h = _apply_last(h, w, scale, shift, tile_n=tile_n,
                            out_dtype=out_dtype, compute_dtype=compute_dtype)
    return h


# ---------------------------------------------------------------------------
# Parameters & forward
# ---------------------------------------------------------------------------
def init_mlpnet_params(key, nch_input, nch_layers):
    """Parameter init mirroring the PyTorch module's shapes.

    Conv1d(last, outp, 1): weight (outp, last) [k=1 squeezed], bias (outp,)
    BatchNorm1d(outp):     weight (gamma)=1, bias (beta)=0
    """
    params = []
    last = nch_input
    for outp in nch_layers:
        key, kw, kb = jax.random.split(key, 3)
        bound = 1.0 / (last ** 0.5)
        w = jax.random.uniform(kw, (outp, last), jnp.float32, -bound, bound)
        b = jax.random.uniform(kb, (outp,), jnp.float32, -bound, bound)
        params.append({"w": w, "b": b,
                       "gamma": jnp.ones((outp,), jnp.float32),
                       "beta": jnp.zeros((outp,), jnp.float32)})
        last = outp
    return params


def mlpnet_forward(params, x, *, compute_dtype=jnp.bfloat16, eps=1e-5,
                   force_streaming=False):
    """x: (B, C_in, N) -> (B, C_out_last, N), same dtype as x (train-mode BN)."""
    B, c_in, N = x.shape
    out_dtype = x.dtype

    tile_n, n_pad = _choose_tiling(N)
    h = x if n_pad == N else jnp.pad(x, ((0, 0), (0, 0), (0, n_pad - N)))

    if (not force_streaming) and _fits_resident(params, B, c_in, n_pad):
        out = _resident_forward(params, h, n_true=N, eps=eps,
                                compute_dtype=compute_dtype, out_dtype=out_dtype)
    else:
        out = _streaming_forward(params, h, n_true=N, tile_n=tile_n, eps=eps,
                                 compute_dtype=compute_dtype, out_dtype=out_dtype)

    if n_pad != N:
        out = out[:, :, :N]
    return out


def _reference_forward(params, x, eps=1e-5):
    """Plain-JAX f32 reference of the same forward (train-mode BN, with bias)."""
    h = x  # (B, C, N)
    for layer in params:
        h = jnp.einsum("bcn,oc->bon", h, layer["w"]) + layer["b"][None, :, None]
        mean = jnp.mean(h, axis=(0, 2), keepdims=True)
        var = jnp.mean((h - mean) ** 2, axis=(0, 2), keepdims=True)
        h = (h - mean) / jnp.sqrt(var + eps)
        h = h * layer["gamma"][None, :, None] + layer["beta"][None, :, None]
        h = jnp.maximum(h, 0.0)
    return h


if __name__ == "__main__":
    key = jax.random.PRNGKey(0)
    k_in, k_params = jax.random.split(key)

    B, C_IN, N = 2, 4, 16
    NCH_LAYERS = [32, 64]

    x = jax.random.normal(k_in, (B, C_IN, N), dtype=jnp.float32)
    params = init_mlpnet_params(k_params, C_IN, NCH_LAYERS)

    ref = jax.block_until_ready(_reference_forward(params, x))

    # 1) f32 exact-math, fully VMEM-resident single-kernel path (small slab).
    out = jax.block_until_ready(
        mlpnet_forward(params, x, compute_dtype=jnp.float32))
    assert out.shape == (B, NCH_LAYERS[-1], N)
    assert jnp.allclose(out, ref, atol=1e-3, rtol=1e-3), "f32 resident mismatch"

    # 2) f32 exact-math, streaming (tiled, pipelined, fused-stats) path.
    out = jax.block_until_ready(
        mlpnet_forward(params, x, compute_dtype=jnp.float32,
                       force_streaming=True))
    assert out.shape == (B, NCH_LAYERS[-1], N)
    assert jnp.allclose(out, ref, atol=1e-3, rtol=1e-3), "f32 streaming mismatch"

    # 3) bf16 fast paths (bf16 MXU matmuls, bf16 inter-layer activations).
    out = jax.block_until_ready(mlpnet_forward(params, x))
    assert jnp.allclose(out, ref, atol=8e-2, rtol=8e-2), "bf16 resident mismatch"

    out = jax.block_until_ready(mlpnet_forward(params, x, force_streaming=True))
    assert jnp.allclose(out, ref, atol=8e-2, rtol=8e-2), "bf16 streaming mismatch"

    print("KERNEL_OK")
</pallas_src>

<mosaic_0001>
module attributes {stable_mosaic.version = 11 : i64} {
  func.func @_resident_kernel(%arg0: memref<2x4x128xf32, #tpu.memory_space<vmem>>, %arg1: memref<32x4xf32, #tpu.memory_space<vmem>>, %arg2: memref<32x1xf32, #tpu.memory_space<vmem>>, %arg3: memref<32x1xf32, #tpu.memory_space<vmem>>, %arg4: memref<64x32xf32, #tpu.memory_space<vmem>>, %arg5: memref<64x1xf32, #tpu.memory_space<vmem>>, %arg6: memref<64x1xf32, #tpu.memory_space<vmem>>, %arg7: memref<2x64x128xf32, #tpu.memory_space<vmem>>) attributes {dimension_semantics = [], scalar_prefetch = 0 : i64, scratch_operands = 0 : i64, tpu.core_type = #tpu.core_type<tc>} {
    %c0 = arith.constant 0 : index
    %c0_0 = arith.constant 0 : index
    %c0_1 = arith.constant 0 : index
    %0 = vector.load %arg0[%c0, %c0_0, %c0_1] : memref<2x4x128xf32, #tpu.memory_space<vmem>>, vector<1x4x128xf32>
    %1 = vector.shape_cast %0 : vector<1x4x128xf32> to vector<4x128xf32>
    %c1 = arith.constant 1 : index
    %c0_2 = arith.constant 0 : index
    %c0_3 = arith.constant 0 : index
    %2 = vector.load %arg0[%c1, %c0_2, %c0_3] : memref<2x4x128xf32, #tpu.memory_space<vmem>>, vector<1x4x128xf32>
    %3 = vector.shape_cast %2 : vector<1x4x128xf32> to vector<4x128xf32>
    %c0_4 = arith.constant 0 : index
    %c0_5 = arith.constant 0 : index
    %4 = vector.load %arg1[%c0_4, %c0_5] : memref<32x4xf32, #tpu.memory_space<vmem>>, vector<32x4xf32>
    %cst = arith.constant dense<0.000000e+00> : vector<32x128xf32>
    %5 = tpu.matmul %4, %1, %cst {dimension_numbers = #tpu.dot_dimension_numbers<[1], [0], [0], [1], [0, 0, 1, 1], [], []>} : vector<32x4xf32>, vector<4x128xf32>, vector<32x128xf32> -> vector<32x128xf32>
    %cst_6 = arith.constant dense<0.000000e+00> : vector<32x128xf32>
    %6 = tpu.matmul %4, %3, %cst_6 {dimension_numbers = #tpu.dot_dimension_numbers<[1], [0], [0], [1], [0, 0, 1, 1], [], []>} : vector<32x4xf32>, vector<4x128xf32>, vector<32x128xf32> -> vector<32x128xf32>
    %cst_7 = arith.constant dense<0.000000e+00> : vector<32xf32>
    %7 = vector.multi_reduction <add>, %5, %cst_7 [1] : vector<32x128xf32> to vector<32xf32>
    %8 = vector.shape_cast %7 : vector<32xf32> to vector<32x1xf32>
    %cst_8 = arith.constant 0.000000e+00 : f32
    %9 = vector.broadcast %cst_8 : f32 to vector<32x1xf32>
    %10 = arith.addf %9, %8 : vector<32x1xf32>
    %cst_9 = arith.constant dense<0.000000e+00> : vector<32xf32>
    %11 = vector.multi_reduction <add>, %6, %cst_9 [1] : vector<32x128xf32> to vector<32xf32>
    %12 = vector.shape_cast %11 : vector<32xf32> to vector<32x1xf32>
    %13 = arith.addf %10, %12 : vector<32x1xf32>
    %14 = arith.mulf %5, %5 : vector<32x128xf32>
    %cst_10 = arith.constant dense<0.000000e+00> : vector<32xf32>
    %15 = vector.multi_reduction <add>, %14, %cst_10 [1] : vector<32x128xf32> to vector<32xf32>
    %16 = vector.shape_cast %15 : vector<32xf32> to vector<32x1xf32>
    %cst_11 = arith.constant 0.000000e+00 : f32
    %17 = vector.broadcast %cst_11 : f32 to vector<32x1xf32>
    %18 = arith.addf %17, %16 : vector<32x1xf32>
    %19 = arith.mulf %6, %6 : vector<32x128xf32>
    %cst_12 = arith.constant dense<0.000000e+00> : vector<32xf32>
    %20 = vector.multi_reduction <add>, %19, %cst_12 [1] : vector<32x128xf32> to vector<32xf32>
    %21 = vector.shape_cast %20 : vector<32xf32> to vector<32x1xf32>
    %22 = arith.addf %18, %21 : vector<32x1xf32>
    %cst_13 = arith.constant 3.125000e-02 : f32
    %23 = vector.broadcast %cst_13 : f32 to vector<32x1xf32>
    %24 = arith.mulf %13, %23 : vector<32x1xf32>
    %cst_14 = arith.constant 3.125000e-02 : f32
    %25 = vector.broadcast %cst_14 : f32 to vector<32x1xf32>
    %26 = arith.mulf %22, %25 : vector<32x1xf32>
    %27 = arith.mulf %24, %24 : vector<32x1xf32>
    %28 = arith.subf %26, %27 : vector<32x1xf32>
    %cst_15 = arith.constant 0.000000e+00 : f32
    %29 = vector.broadcast %cst_15 : f32 to vector<32x1xf32>
    %30 = arith.maximumf %28, %29 : vector<32x1xf32>
    %c0_16 = arith.constant 0 : index
    %c0_17 = arith.constant 0 : index
    %31 = vector.load %arg2[%c0_16, %c0_17] : memref<32x1xf32, #tpu.memory_space<vmem>>, vector<32x1xf32>
    %cst_18 = arith.constant 9.99999974E-6 : f32
    %32 = vector.broadcast %cst_18 : f32 to vector<32x1xf32>
    %33 = arith.addf %30, %32 : vector<32x1xf32>
    %34 = math.rsqrt %33 : vector<32x1xf32>
    %35 = arith.mulf %31, %34 : vector<32x1xf32>
    %c0_19 = arith.constant 0 : index
    %c0_20 = arith.constant 0 : index
    %36 = vector.load %arg3[%c0_19, %c0_20] : memref<32x1xf32, #tpu.memory_space<vmem>>, vector<32x1xf32>
    %37 = arith.mulf %24, %35 : vector<32x1xf32>
    %38 = arith.subf %36, %37 : vector<32x1xf32>
    %39 = vector.broadcast %35 : vector<32x1xf32> to vector<32x128xf32>
    %40 = arith.mulf %5, %39 : vector<32x128xf32>
    %41 = vector.broadcast %38 : vector<32x1xf32> to vector<32x128xf32>
    %42 = arith.addf %40, %41 : vector<32x128xf32>
    %cst_21 = arith.constant 0.000000e+00 : f32
    %43 = vector.broadcast %cst_21 : f32 to vector<32x128xf32>
    %44 = arith.maximumf %42, %43 : vector<32x128xf32>
    %45 = tpu.iota {dimensions = array<i32: 1>} : vector<32x128xi32>
    %c16_i32 = arith.constant 16 : i32
    %46 = vector.broadcast %c16_i32 : i32 to vector<32x128xi32>
    %47 = arith.cmpi slt, %45, %46 : vector<32x128xi32>
    %cst_22 = arith.constant 0.000000e+00 : f32
    %48 = vector.broadcast %cst_22 : f32 to vector<32x128xf32>
    %49 = arith.select %47, %44, %48 : vector<32x128xi1>, vector<32x128xf32>
    %50 = vector.broadcast %35 : vector<32x1xf32> to vector<32x128xf32>
    %51 = arith.mulf %6, %50 : vector<32x128xf32>
    %52 = vector.broadcast %38 : vector<32x1xf32> to vector<32x128xf32>
    %53 = arith.addf %51, %52 : vector<32x128xf32>
    %cst_23 = arith.constant 0.000000e+00 : f32
    %54 = vector.broadcast %cst_23 : f32 to vector<32x128xf32>
    %55 = arith.maximumf %53, %54 : vector<32x128xf32>
    %56 = tpu.iota {dimensions = array<i32: 1>} : vector<32x128xi32>
    %c16_i32_24 = arith.constant 16 : i32
    %57 = vector.broadcast %c16_i32_24 : i32 to vector<32x128xi32>
    %58 = arith.cmpi slt, %56, %57 : vector<32x128xi32>
    %cst_25 = arith.constant 0.000000e+00 : f32
    %59 = vector.broadcast %cst_25 : f32 to vector<32x128xf32>
    %60 = arith.select %58, %55, %59 : vector<32x128xi1>, vector<32x128xf32>
    %c0_26 = arith.constant 0 : index
    %c0_27 = arith.constant 0 : index
    %61 = vector.load %arg4[%c0_26, %c0_27] : memref<64x32xf32, #tpu.memory_space<vmem>>, vector<64x32xf32>
    %cst_28 = arith.constant dense<0.000000e+00> : vector<64x128xf32>
    %62 = tpu.matmul %61, %49, %cst_28 {dimension_numbers = #tpu.dot_dimension_numbers<[1], [0], [0], [1], [0, 0, 1, 1], [], []>} : vector<64x32xf32>, vector<32x128xf32>, vector<64x128xf32> -> vector<64x128xf32>
    %cst_29 = arith.constant dense<0.000000e+00> : vector<64x128xf32>
    %63 = tpu.matmul %61, %60, %cst_29 {dimension_numbers = #tpu.dot_dimension_numbers<[1], [0], [0], [1], [0, 0, 1, 1], [], []>} : vector<64x32xf32>, vector<32x128xf32>, vector<64x128xf32> -> vector<64x128xf32>
    %cst_30 = arith.constant dense<0.000000e+00> : vector<64xf32>
    %64 = vector.multi_reduction <add>, %62, %cst_30 [1] : vector<64x128xf32> to vector<64xf32>
    %65 = vector.shape_cast %64 : vector<64xf32> to vector<64x1xf32>
    %cst_31 = arith.constant 0.000000e+00 : f32
    %66 = vector.broadcast %cst_31 : f32 to vector<64x1xf32>
    %67 = arith.addf %66, %65 : vector<64x1xf32>
    %cst_32 = arith.constant dense<0.000000e+00> : vector<64xf32>
    %68 = vector.multi_reduction <add>, %63, %cst_32 [1] : vector<64x128xf32> to vector<64xf32>
    %69 = vector.shape_cast %68 : vector<64xf32> to vector<64x1xf32>
    %70 = arith.addf %67, %69 : vector<64x1xf32>
    %71 = arith.mulf %62, %62 : vector<64x128xf32>
    %cst_33 = arith.constant dense<0.000000e+00> : vector<64xf32>
    %72 = vector.multi_reduction <add>, %71, %cst_33 [1] : vector<64x128xf32> to vector<64xf32>
    %73 = vector.shape_cast %72 : vector<64xf32> to vector<64x1xf32>
    %cst_34 = arith.constant 0.000000e+00 : f32
    %74 = vector.broadcast %cst_34 : f32 to vector<64x1xf32>
    %75 = arith.addf %74, %73 : vector<64x1xf32>
    %76 = arith.mulf %63, %63 : vector<64x128xf32>
    %cst_35 = arith.constant dense<0.000000e+00> : vector<64xf32>
    %77 = vector.multi_reduction <add>, %76, %cst_35 [1] : vector<64x128xf32> to vector<64xf32>
    %78 = vector.shape_cast %77 : vector<64xf32> to vector<64x1xf32>
    %79 = arith.addf %75, %78 : vector<64x1xf32>
    %cst_36 = arith.constant 3.125000e-02 : f32
    %80 = vector.broadcast %cst_36 : f32 to vector<64x1xf32>
    %81 = arith.mulf %70, %80 : vector<64x1xf32>
    %cst_37 = arith.constant 3.125000e-02 : f32
    %82 = vector.broadcast %cst_37 : f32 to vector<64x1xf32>
    %83 = arith.mulf %79, %82 : vector<64x1xf32>
    %84 = arith.mulf %81, %81 : vector<64x1xf32>
    %85 = arith.subf %83, %84 : vector<64x1xf32>
    %cst_38 = arith.constant 0.000000e+00 : f32
    %86 = vector.broadcast %cst_38 : f32 to vector<64x1xf32>
    %87 = arith.maximumf %85, %86 : vector<64x1xf32>
    %c0_39 = arith.constant 0 : index
    %c0_40 = arith.constant 0 : index
    %88 = vector.load %arg5[%c0_39, %c0_40] : memref<64x1xf32, #tpu.memory_space<vmem>>, vector<64x1xf32>
    %cst_41 = arith.constant 9.99999974E-6 : f32
    %89 = vector.broadcast %cst_41 : f32 to vector<64x1xf32>
    %90 = arith.addf %87, %89 : vector<64x1xf32>
    %91 = math.rsqrt %90 : vector<64x1xf32>
    %92 = arith.mulf %88, %91 : vector<64x1xf32>
    %c0_42 = arith.constant 0 : index
    %c0_43 = arith.constant 0 : index
    %93 = vector.load %arg6[%c0_42, %c0_43] : memref<64x1xf32, #tpu.memory_space<vmem>>, vector<64x1xf32>
    %94 = arith.mulf %81, %92 : vector<64x1xf32>
    %95 = arith.subf %93, %94 : vector<64x1xf32>
    %96 = vector.broadcast %92 : vector<64x1xf32> to vector<64x128xf32>
    %97 = arith.mulf %62, %96 : vector<64x128xf32>
    %98 = vector.broadcast %95 : vector<64x1xf32> to vector<64x128xf32>
    %99 = arith.addf %97, %98 : vector<64x128xf32>
    %cst_44 = arith.constant 0.000000e+00 : f32
    %100 = vector.broadcast %cst_44 : f32 to vector<64x128xf32>
    %101 = arith.maximumf %99, %100 : vector<64x128xf32>
    %c0_45 = arith.constant 0 : index
    %c0_46 = arith.constant 0 : index
    %c0_47 = arith.constant 0 : index
    %102 = vector.load %arg7[%c0_45, %c0_46, %c0_47] : memref<2x64x128xf32, #tpu.memory_space<vmem>>, vector<1x64x128xf32>
    %103 = vector.shape_cast %102 : vector<1x64x128xf32> to vector<64x128xf32>
    %104 = vector.shape_cast %101 : vector<64x128xf32> to vector<1x64x128xf32>
    tpu.vector_store %arg7[%c0_45, %c0_46, %c0_47], %104 {strides = array<i32>} : memref<2x64x128xf32, #tpu.memory_space<vmem>>, vector<1x64x128xf32>,
    %105 = vector.broadcast %92 : vector<64x1xf32> to vector<64x128xf32>
    %106 = arith.mulf %63, %105 : vector<64x128xf32>
    %107 = vector.broadcast %95 : vector<64x1xf32> to vector<64x128xf32>
    %108 = arith.addf %106, %107 : vector<64x128xf32>
    %cst_48 = arith.constant 0.000000e+00 : f32
    %109 = vector.broadcast %cst_48 : f32 to vector<64x128xf32>
    %110 = arith.maximumf %108, %109 : vector<64x128xf32>
    %c1_49 = arith.constant 1 : index
    %c0_50 = arith.constant 0 : index
    %c0_51 = arith.constant 0 : index
    %111 = vector.load %arg7[%c1_49, %c0_50, %c0_51] : memref<2x64x128xf32, #tpu.memory_space<vmem>>, vector<1x64x128xf32>
    %112 = vector.shape_cast %111 : vector<1x64x128xf32> to vector<64x128xf32>
    %113 = vector.shape_cast %110 : vector<64x128xf32> to vector<1x64x128xf32>
    tpu.vector_store %arg7[%c1_49, %c0_50, %c0_51], %113 {strides = array<i32>} : memref<2x64x128xf32, #tpu.memory_space<vmem>>, vector<1x64x128xf32>,
    return
  }
}

</mosaic_0001>

<llo_original>
// kernel: tpu_custom_call.1
$region0: #{tpu_custom_call.1}
  #allocation0 [shape = 'u32[]', space=smem, size = 0x4, offset = 0x4, fixed_abs, tag = 'smem constant byte address 0x4 - core index']
  #allocation1 [shape = 'u32[144,128]{1,0:T(1,128)}', space=vmem, size = 0x12000, scoped, tag = 'internal scratch']
  %s0 = inlined_call_operand.vmem [shape: f32[2,4,128], index: 0, kind: input, shape index: {}]
  %s1 = inlined_call_operand.vmem [shape: f32[32,4], index: 1, kind: input, shape index: {}]
  %s2 = inlined_call_operand.vmem [shape: f32[32,1], index: 2, kind: input, shape index: {}]
  %s3 = inlined_call_operand.vmem [shape: f32[32,1], index: 3, kind: input, shape index: {}]
  %s4 = inlined_call_operand.vmem [shape: f32[64,32], index: 4, kind: input, shape index: {}]
  %s5 = inlined_call_operand.vmem [shape: f32[64,1], index: 5, kind: input, shape index: {}]
  %s6 = inlined_call_operand.vmem [shape: f32[64,1], index: 6, kind: input, shape index: {}]
  %s7 = inlined_call_operand.hbm [shape: f32[2,64,128], index: 7, kind: output, shape index: {}]
  %s8 = sld [smem:[#allocation0]]
  $region38: #{tpu_custom_call.1} parent=0
    _
  %s10 = ssub.s32 1, %s8
  %s11 = scalar_select 0, %s10, %s8
  $region1: #{tpu_custom_call.1} parent=0
    #allocation2 [shape = 'u8[65536]{0}', space=vmem, size = 0x10000, scoped, tag = 'output window, operand 0, single buffered']
    #allocation3 [shape = 's32[1]{0}', space=sflag, size = 0x4, scoped, tag = 'scoped memory for tpu_custom_call.1']
    %12 = vsyncpa [#allocation3], 0
    // Predicated region
    $region2: #{tpu_custom_call.1} parent=1 // pred_check
      _
    $region3: #{tpu_custom_call.1} parent=1 // pred_check_branch
      %14 = sbr.rel (0) target = $region5
    $region4: #{tpu_custom_call.1} parent=1 // pred_region
      _
    $region5: #{tpu_custom_call.1} parent=1 // pred_fallthru
      _
    // Predicated region
    $region6: #{tpu_custom_call.1} parent=1 // pred_check
      _
    $region7: #{tpu_custom_call.1} parent=1 // pred_check_branch
      %16 = sbr.rel (0) target = $region9
    $region8: #{tpu_custom_call.1} parent=1 // pred_region
      _
    $region9: #{tpu_custom_call.1} parent=1 // pred_fallthru
      _
    // Predicated region
    $region10: #{tpu_custom_call.1} parent=1 // pred_check
      _
    $region11: #{tpu_custom_call.1} parent=1 // pred_check_branch
      %18 = sbr.rel (0) target = $region13
    $region12: #{tpu_custom_call.1} parent=1 // pred_region
      _
    $region13: #{tpu_custom_call.1} parent=1 // pred_fallthru
      _
    // Predicated region
    $region14: #{tpu_custom_call.1} parent=1 // pred_check
      _
    $region15: #{tpu_custom_call.1} parent=1 // pred_check_branch
      %20 = sbr.rel (0) target = $region17
    $region16: #{tpu_custom_call.1} parent=1 // pred_region
      _
    $region17: #{tpu_custom_call.1} parent=1 // pred_fallthru
      _
    // Predicated region
    $region18: #{tpu_custom_call.1} parent=1 // pred_check
      _
    $region19: #{tpu_custom_call.1} parent=1 // pred_check_branch
      %22 = sbr.rel (0) target = $region21
    $region20: #{tpu_custom_call.1} parent=1 // pred_region
      _
    $region21: #{tpu_custom_call.1} parent=1 // pred_fallthru
      _
    // Predicated region
    $region22: #{tpu_custom_call.1} parent=1 // pred_check
      _
    $region23: #{tpu_custom_call.1} parent=1 // pred_check_branch
      %24 = sbr.rel (0) target = $region25
    $region24: #{tpu_custom_call.1} parent=1 // pred_region
      _
    $region25: #{tpu_custom_call.1} parent=1 // pred_fallthru
      _
    // Predicated region
    $region26: #{tpu_custom_call.1} parent=1 // pred_check
      _
    $region27: #{tpu_custom_call.1} parent=1 // pred_check_branch
      %26 = sbr.rel (0) target = $region29
    $region28: #{tpu_custom_call.1} parent=1 // pred_region
      _
    $region29: #{tpu_custom_call.1} parent=1 // pred_fallthru
      _
    %v27 = vld [vmem:[%s0] sm:$0xf]
    %s28 = scalar_lea.vmem %s0, 4
    %v29 = vld [vmem:[%s28] sm:$0xf]
    %v30 = vld [vmem:[%s1] sm:$0xff]
    %v31 = vld [vmem:[%s1 + $0x8] sm:$0xff]
    %v32 = vld [vmem:[%s1 + $0x10] sm:$0xff]
    %v33 = vld [vmem:[%s1 + $0x18] sm:$0xff]
    %vm34 = vcmask 31744
    %v36 = vsel %vm34, %v30, 0
    %v39 = vsel %vm34, %v31, 0
    %v42 = vsel %vm34, %v32, 0
    %v45 = vsel %vm34, %v33, 0
    %vm47 = vcmask 1043456
    %v49 = vsel %vm47, %v27, 0
    %51 = vmatprep.subr.mxu0 0.0
    %52 = vmatpush1.msra.mxu0 %v49
    %53 = vmatprep.subr.mxu0 0.0
    %54 = vmatpush1.msra.mxu0 0.0
    %55 = vmatprep.subr.mxu0 0.0
    %56 = vmatpush1.msra.mxu0 0.0
    %57 = vmatprep.subr.mxu0 0.0
    %58 = vmatpush1.msra.mxu0 0.0
    %59 = vmatprep.subr.mxu0 0.0
    %60 = vmatpush1.msra.mxu0 0.0
    %61 = vmatprep.subr.mxu0 0.0
    %62 = vmatpush1.msra.mxu0 0.0
    %63 = vmatprep.subr.mxu0 0.0
    %64 = vmatpush1.msra.mxu0 0.0
    %65 = vmatprep.subr.mxu0 0.0
    %66 = vmatpush1.msra.mxu0 0.0
    %67 = vmatprep.subr.mxu0 0.0
    %68 = vmatpush1.msra.mxu0 0.0
    %69 = vmatprep.subr.mxu0 0.0
    %70 = vmatpush1.msra.mxu0 0.0
    %71 = vmatprep.subr.mxu0 0.0
    %72 = vmatpush1.msra.mxu0 0.0
    %73 = vmatprep.subr.mxu0 0.0
    %74 = vmatpush1.msra.mxu0 0.0
    %75 = vmatprep.subr.mxu0 0.0
    %76 = vmatpush1.msra.mxu0 0.0
    %77 = vmatprep.subr.mxu0 0.0
    %78 = vmatpush1.msra.mxu0 0.0
    %79 = vmatprep.subr.mxu0 0.0
    %80 = vmatpush1.msra.mxu0 0.0
    %81 = vmatprep.subr.mxu0 0.0
    %82 = vmatpush1.msra.mxu0 0.0
    %83 = vmatprep.subr.mxu0 0.0
    %84 = vmatpush1.msra.mxu0 0.0
    %85 = vmatprep.subr.mxu0 0.0
    %86 = vmatpush1.msra.mxu0 0.0
    %87 = vmatprep.subr.mxu0 0.0
    %88 = vmatpush1.msra.mxu0 0.0
    %89 = vmatprep.subr.mxu0 0.0
    %90 = vmatpush1.msra.mxu0 0.0
    %91 = vmatprep.subr.mxu0 0.0
    %92 = vmatpush1.msra.mxu0 0.0
    %93 = vmatprep.subr.mxu0 0.0
    %94 = vmatpush1.msra.mxu0 0.0
    %95 = vmatprep.subr.mxu0 0.0
    %96 = vmatpush1.msra.mxu0 0.0
    %97 = vmatprep.subr.mxu0 0.0
    %98 = vmatpush1.msra.mxu0 0.0
    %99 = vmatprep.subr.mxu0 0.0
    %100 = vmatpush1.msra.mxu0 0.0
    %101 = vmatprep.subr.mxu0 0.0
    %102 = vmatpush1.msra.mxu0 0.0
    %103 = vmatprep.subr.mxu0 0.0
    %104 = vmatpush1.msra.mxu0 0.0
    %105 = vmatprep.subr.mxu0 0.0
    %106 = vmatpush1.msra.mxu0 0.0
    %107 = vmatprep.subr.mxu0 0.0
    %108 = vmatpush1.msra.mxu0 0.0
    %109 = vmatprep.subr.mxu0 0.0
    %110 = vmatpush1.msra.mxu0 0.0
    %111 = vmatprep.subr.mxu0 0.0
    %112 = vmatpush1.msra.mxu0 0.0
    %113 = vmatprep.subr.mxu0 0.0
    %114 = vmatpush1.msra.mxu0 0.0
    %115 = vmatprep.mubr.f32.mxu0 0.0
    %116 = vmatmul.mubr.f32.gmra.mrb[0].mxu0 %v36
    %v117 = vpop.f32.mrb[0].mxu0
    %v118 = vadd.f32 0.0, %v117
    %v119 = vpop.f32.mrb[0].mxu0
    %120 = vmatprep.mubr.f32.mxu0 0.0
    %121 = vmatmul.mubr.f32.gmra.mrb[0].mxu0 %v39
    %v122 = vpop.f32.mrb[0].mxu0
    %v123 = vadd.f32 0.0, %v122
    %v124 = vpop.f32.mrb[0].mxu0
    %125 = vmatprep.mubr.f32.mxu0 0.0
    %126 = vmatmul.mubr.f32.gmra.mrb[0].mxu0 %v42
    %v127 = vpop.f32.mrb[0].mxu0
    %v128 = vadd.f32 0.0, %v127
    %v129 = vpop.f32.mrb[0].mxu0
    %130 = vmatprep.mubr.f32.mxu0 0.0
    %131 = vmatmul.mubr.f32.gmra.mrb[0].mxu0 %v45
    %v132 = vpop.f32.mrb[0].mxu0
    %v133 = vadd.f32 0.0, %v132
    %v134 = vpop.f32.mrb[0].mxu0
    %135 = vdwg.mxu0
    %v137 = vsel %vm47, %v29, 0
    %139 = vmatprep.subr.mxu0 0.0
    %140 = vmatpush1.msra.mxu0 %v137
    %141 = vmatprep.subr.mxu0 0.0
    %142 = vmatpush1.msra.mxu0 0.0
    %143 = vmatprep.subr.mxu0 0.0
    %144 = vmatpush1.msra.mxu0 0.0
    %145 = vmatprep.subr.mxu0 0.0
    %146 = vmatpush1.msra.mxu0 0.0
    %147 = vmatprep.subr.mxu0 0.0
    %148 = vmatpush1.msra.mxu0 0.0
    %149 = vmatprep.subr.mxu0 0.0
    %150 = vmatpush1.msra.mxu0 0.0
    %151 = vmatprep.subr.mxu0 0.0
    %152 = vmatpush1.msra.mxu0 0.0
    %153 = vmatprep.subr.mxu0 0.0
    %154 = vmatpush1.msra.mxu0 0.0
    %155 = vmatprep.subr.mxu0 0.0
    %156 = vmatpush1.msra.mxu0 0.0
    %157 = vmatprep.subr.mxu0 0.0
    %158 = vmatpush1.msra.mxu0 0.0
    %159 = vmatprep.subr.mxu0 0.0
    %160 = vmatpush1.msra.mxu0 0.0
    %161 = vmatprep.subr.mxu0 0.0
    %162 = vmatpush1.msra.mxu0 0.0
    %163 = vmatprep.subr.mxu0 0.0
    %164 = vmatpush1.msra.mxu0 0.0
    %165 = vmatprep.subr.mxu0 0.0
    %166 = vmatpush1.msra.mxu0 0.0
    %167 = vmatprep.subr.mxu0 0.0
    %168 = vmatpush1.msra.mxu0 0.0
    %169 = vmatprep.subr.mxu0 0.0
    %170 = vmatpush1.msra.mxu0 0.0
    %171 = vmatprep.subr.mxu0 0.0
    %172 = vmatpush1.msra.mxu0 0.0
    %173 = vmatprep.subr.mxu0 0.0
    %174 = vmatpush1.msra.mxu0 0.0
    %175 = vmatprep.subr.mxu0 0.0
    %176 = vmatpush1.msra.mxu0 0.0
    %177 = vmatprep.subr.mxu0 0.0
    %178 = vmatpush1.msra.mxu0 0.0
    %179 = vmatprep.subr.mxu0 0.0
    %180 = vmatpush1.msra.mxu0 0.0
    %181 = vmatprep.subr.mxu0 0.0
    %182 = vmatpush1.msra.mxu0 0.0
    %183 = vmatprep.subr.mxu0 0.0
    %184 = vmatpush1.msra.mxu0 0.0
    %185 = vmatprep.subr.mxu0 0.0
    %186 = vmatpush1.msra.mxu0 0.0
    %187 = vmatprep.subr.mxu0 0.0
    %188 = vmatpush1.msra.mxu0 0.0
    %189 = vmatprep.subr.mxu0 0.0
    %190 = vmatpush1.msra.mxu0 0.0
    %191 = vmatprep.subr.mxu0 0.0
    %192 = vmatpush1.msra.mxu0 0.0
    %193 = vmatprep.subr.mxu0 0.0
    %194 = vmatpush1.msra.mxu0 0.0
    %195 = vmatprep.subr.mxu0 0.0
    %196 = vmatpush1.msra.mxu0 0.0
    %197 = vmatprep.subr.mxu0 0.0
    %198 = vmatpush1.msra.mxu0 0.0
    %199 = vmatprep.subr.mxu0 0.0
    %200 = vmatpush1.msra.mxu0 0.0
    %201 = vmatprep.subr.mxu0 0.0
    %202 = vmatpush1.msra.mxu0 0.0
    %203 = vmatprep.mubr.f32.mxu0 0.0
    %204 = vmatmul.mubr.f32.gmra.mrb[0].mxu0 %v36
    %v205 = vpop.f32.mrb[0].mxu0
    %v206 = vadd.f32 0.0, %v205
    %v207 = vpop.f32.mrb[0].mxu0
    %208 = vmatprep.mubr.f32.mxu0 0.0
    %209 = vmatmul.mubr.f32.gmra.mrb[0].mxu0 %v39
    %v210 = vpop.f32.mrb[0].mxu0
    %v211 = vadd.f32 0.0, %v210
    %v212 = vpop.f32.mrb[0].mxu0
    %213 = vmatprep.mubr.f32.mxu0 0.0
    %214 = vmatmul.mubr.f32.gmra.mrb[0].mxu0 %v42
    %v215 = vpop.f32.mrb[0].mxu0
    %v216 = vadd.f32 0.0, %v215
    %v217 = vpop.f32.mrb[0].mxu0
    %218 = vmatprep.mubr.f32.mxu0 0.0
    %219 = vmatmul.mubr.f32.gmra.mrb[0].mxu0 %v45
    %v220 = vpop.f32.mrb[0].mxu0
    %v221 = vadd.f32 0.0, %v220
    %v222 = vpop.f32.mrb[0].mxu0
    %223 = vdwg.mxu0
    %224 = vadd.xlane.f32.xlu0 %v118
    %v225 = vpop.xlane.xlu0 %224
    %226 = vadd.xlane.f32.xlu0 %v123
    %v227 = vpop.xlane.xlu0 %226
    %228 = vadd.xlane.f32.xlu0 %v128
    %v229 = vpop.xlane.xlu0 %228
    %230 = vadd.xlane.f32.xlu0 %v133
    %v231 = vpop.xlane.xlu0 %230
    %v232 = vadd.f32 %v225, 0.0
    %v233 = vadd.f32 %v227, 0.0
    %v234 = vadd.f32 %v229, 0.0
    %v235 = vadd.f32 %v231, 0.0
    %236 = vadd.xlane.f32.xlu0 %v206
    %v237 = vpop.xlane.xlu0 %236
    %238 = vadd.xlane.f32.xlu0 %v211
    %v239 = vpop.xlane.xlu0 %238
    %240 = vadd.xlane.f32.xlu0 %v216
    %v241 = vpop.xlane.xlu0 %240
    %242 = vadd.xlane.f32.xlu0 %v221
    %v243 = vpop.xlane.xlu0 %242
    %v244 = vadd.f32 %v232, %v237
    %v245 = vadd.f32 %v233, %v239
    %v246 = vadd.f32 %v234, %v241
    %v247 = vadd.f32 %v235, %v243
    %v248 = vmul.f32 %v118, %v118
    %v249 = vmul.f32 %v123, %v123
    %v250 = vmul.f32 %v128, %v128
    %v251 = vmul.f32 %v133, %v133
    %252 = vadd.xlane.f32.xlu0 %v248
    %v253 = vpop.xlane.xlu0 %252
    %254 = vadd.xlane.f32.xlu0 %v249
    %v255 = vpop.xlane.xlu0 %254
    %256 = vadd.xlane.f32.xlu0 %v250
    %v257 = vpop.xlane.xlu0 %256
    %258 = vadd.xlane.f32.xlu0 %v251
    %v259 = vpop.xlane.xlu0 %258
    %v260 = vadd.f32 %v253, 0.0
    %v261 = vadd.f32 %v255, 0.0
    %v262 = vadd.f32 %v257, 0.0
    %v263 = vadd.f32 %v259, 0.0
    %v264 = vmul.f32 %v206, %v206
    %v265 = vmul.f32 %v211, %v211
    %v266 = vmul.f32 %v216, %v216
    %v267 = vmul.f32 %v221, %v221
    %268 = vadd.xlane.f32.xlu0 %v264
    %v269 = vpop.xlane.xlu0 %268
    %270 = vadd.xlane.f32.xlu0 %v265
    %v271 = vpop.xlane.xlu0 %270
    %272 = vadd.xlane.f32.xlu0 %v266
    %v273 = vpop.xlane.xlu0 %272
    %274 = vadd.xlane.f32.xlu0 %v267
    %v275 = vpop.xlane.xlu0 %274
    %v276 = vadd.f32 %v260, %v269
    %v277 = vadd.f32 %v261, %v271
    %v278 = vadd.f32 %v262, %v273
    %v279 = vadd.f32 %v263, %v275
    %v280 = vmul.f32 %v244, 0.03125
    %v281 = vmul.f32 %v245, 0.03125
    %v282 = vmul.f32 %v246, 0.03125
    %v283 = vmul.f32 %v247, 0.03125
    %v284 = vmul.f32 %v276, 0.03125
    %v285 = vmul.f32 %v277, 0.03125
    %v286 = vmul.f32 %v278, 0.03125
    %v287 = vmul.f32 %v279, 0.03125
    %v288 = vmul.f32 %v280, %v280
    %v289 = vmul.f32 %v281, %v281
    %v290 = vmul.f32 %v282, %v282
    %v291 = vmul.f32 %v283, %v283
    %v292 = vsub.f32 %v284, %v288
    %v293 = vsub.f32 %v285, %v289
    %v294 = vsub.f32 %v286, %v290
    %v295 = vsub.f32 %v287, %v291
    %v296 = vmax.f32 %v292, 0.0
    %v297 = vmax.f32 %v293, 0.0
    %v298 = vmax.f32 %v294, 0.0
    %v299 = vmax.f32 %v295, 0.0
    %v300 = vld [vmem:[%s2] sm:$0xff]
    %v301 = vld [vmem:[%s2 + $0x8] sm:$0xff]
    %v302 = vld [vmem:[%s2 + $0x10] sm:$0xff]
    %v303 = vld [vmem:[%s2 + $0x18] sm:$0xff]
    %v304 = vadd.f32 %v296, 1e-05
    %v305 = vadd.f32 %v297, 1e-05
    %v306 = vadd.f32 %v298, 1e-05
    %v307 = vadd.f32 %v299, 1e-05
    %v308 = vrsqrt.pop %v304
    %v309 = vrsqrt.pop %v305
    %v310 = vrsqrt.pop %v306
    %v311 = vrsqrt.pop %v307
    %v312 = vmul.f32 %v300, %v308
    %v313 = vmul.f32 %v301, %v309
    %v314 = vmul.f32 %v302, %v310
    %v315 = vmul.f32 %v303, %v311
    %v316 = vld [vmem:[%s3] sm:$0xff]
    %v317 = vld [vmem:[%s3 + $0x8] sm:$0xff]
    %v318 = vld [vmem:[%s3 + $0x10] sm:$0xff]
    %v319 = vld [vmem:[%s3 + $0x18] sm:$0xff]
    %v320 = vmul.f32 %v280, %v312
    %v321 = vmul.f32 %v281, %v313
    %v322 = vmul.f32 %v282, %v314
    %v323 = vmul.f32 %v283, %v315
    %v324 = vsub.f32 %v316, %v320
    %v325 = vsub.f32 %v317, %v321
    %v326 = vsub.f32 %v318, %v322
    %v327 = vsub.f32 %v319, %v323
    %329 = vset.pattern.permute.xlu0 0
    %330 = vperm.xlu0 %329, %v312
    %v331 = vpop.permute.xlu0 %330
    %334 = vset.pattern.permute.xlu0 0
    %335 = vperm.xlu0 %334, %v313
    %v336 = vpop.permute.xlu0 %335
    %339 = vset.pattern.permute.xlu0 0
    %340 = vperm.xlu0 %339, %v314
    %v341 = vpop.permute.xlu0 %340
    %344 = vset.pattern.permute.xlu0 0
    %345 = vperm.xlu0 %344, %v315
    %v346 = vpop.permute.xlu0 %345
    %v348 = vmul.f32 %v118, %v331
    %v349 = vmul.f32 %v123, %v336
    %v350 = vmul.f32 %v128, %v341
    %v351 = vmul.f32 %v133, %v346
    %353 = vset.pattern.permute.xlu0 0
    %354 = vperm.xlu0 %353, %v324
    %v355 = vpop.permute.xlu0 %354
    %358 = vset.pattern.permute.xlu0 0
    %359 = vperm.xlu0 %358, %v325
    %v360 = vpop.permute.xlu0 %359
    %363 = vset.pattern.permute.xlu0 0
    %364 = vperm.xlu0 %363, %v326
    %v365 = vpop.permute.xlu0 %364
    %368 = vset.pattern.permute.xlu0 0
    %369 = vperm.xlu0 %368, %v327
    %v370 = vpop.permute.xlu0 %369
    %v372 = vadd.f32 %v348, %v355
    %v373 = vadd.f32 %v349, %v360
    %v374 = vadd.f32 %v350, %v365
    %v375 = vadd.f32 %v351, %v370
    %v376 = vmax.f32 %v372, 0.0
    %v377 = vmax.f32 %v373, 0.0
    %v378 = vmax.f32 %v374, 0.0
    %v379 = vmax.f32 %v375, 0.0
    %v380 = vlaneseq
    %v381 = vand.u32 %v380, 127
    %vm382 = vcmp.lt.s32.totalorder %v381, 16
    %v383 = vsel %vm382, %v376, 0.0
    %v384 = vsel %vm382, %v377, 0.0
    %v385 = vsel %vm382, %v378, 0.0
    %v386 = vsel %vm382, %v379, 0.0
    %v387 = vmul.f32 %v206, %v331
    %v388 = vmul.f32 %v211, %v336
    %v389 = vmul.f32 %v216, %v341
    %v390 = vmul.f32 %v221, %v346
    %v391 = vadd.f32 %v387, %v355
    %v392 = vadd.f32 %v388, %v360
    %v393 = vadd.f32 %v389, %v365
    %v394 = vadd.f32 %v390, %v370
    %v395 = vmax.f32 %v391, 0.0
    %v396 = vmax.f32 %v392, 0.0
    %v397 = vmax.f32 %v393, 0.0
    %v398 = vmax.f32 %v394, 0.0
    %v399 = vsel %vm382, %v395, 0.0
    %v400 = vsel %vm382, %v396, 0.0
    %v401 = vsel %vm382, %v397, 0.0
    %v402 = vsel %vm382, %v398, 0.0
    %v403 = vld [vmem:[%s4] sm:$0xff]
    %v404 = vld [vmem:[%s4 + $0x8] sm:$0xff]
    %v405 = vld [vmem:[%s4 + $0x10] sm:$0xff]
    %v406 = vld [vmem:[%s4 + $0x18] sm:$0xff]
    %v407 = vld [vmem:[%s4 + $0x20] sm:$0xff]
    %v408 = vld [vmem:[%s4 + $0x28] sm:$0xff]
    %v409 = vld [vmem:[%s4 + $0x30] sm:$0xff]
    %v410 = vld [vmem:[%s4 + $0x38] sm:$0xff]
    %vm411 = vcmask 261120
    %v413 = vsel %vm411, %v403, 0
    %v416 = vsel %vm411, %v404, 0
    %v419 = vsel %vm411, %v405, 0
    %v422 = vsel %vm411, %v406, 0
    %v425 = vsel %vm411, %v407, 0
    %v428 = vsel %vm411, %v408, 0
    %v431 = vsel %vm411, %v409, 0
    %v434 = vsel %vm411, %v410, 0
    %436 = vmatprep.subr.mxu0 0.0
    %437 = vmatpush1.msra.mxu0 %v383
    %438 = vmatprep.subr.mxu0 0.0
    %439 = vmatpush1.msra.mxu0 %v384
    %440 = vmatprep.subr.mxu0 0.0
    %441 = vmatpush1.msra.mxu0 %v385
    %442 = vmatprep.subr.mxu0 0.0
    %443 = vmatpush1.msra.mxu0 %v386
    %444 = vmatprep.subr.mxu0 0.0
    %445 = vmatpush1.msra.mxu0 0.0
    %446 = vmatprep.subr.mxu0 0.0
    %447 = vmatpush1.msra.mxu0 0.0
    %448 = vmatprep.subr.mxu0 0.0
    %449 = vmatpush1.msra.mxu0 0.0
    %450 = vmatprep.subr.mxu0 0.0
    %451 = vmatpush1.msra.mxu0 0.0
    %452 = vmatprep.subr.mxu0 0.0
    %453 = vmatpush1.msra.mxu0 0.0
    %454 = vmatprep.subr.mxu0 0.0
    %455 = vmatpush1.msra.mxu0 0.0
    %456 = vmatprep.subr.mxu0 0.0
    %457 = vmatpush1.msra.mxu0 0.0
    %458 = vmatprep.subr.mxu0 0.0
    %459 = vmatpush1.msra.mxu0 0.0
    %460 = vmatprep.subr.mxu0 0.0
    %461 = vmatpush1.msra.mxu0 0.0
    %462 = vmatprep.subr.mxu0 0.0
    %463 = vmatpush1.msra.mxu0 0.0
    %464 = vmatprep.subr.mxu0 0.0
    %465 = vmatpush1.msra.mxu0 0.0
    %466 = vmatprep.subr.mxu0 0.0
    %467 = vmatpush1.msra.mxu0 0.0
    %468 = vmatprep.subr.mxu0 0.0
    %469 = vmatpush1.msra.mxu0 0.0
    %470 = vmatprep.subr.mxu0 0.0
    %471 = vmatpush1.msra.mxu0 0.0
    %472 = vmatprep.subr.mxu0 0.0
    %473 = vmatpush1.msra.mxu0 0.0
    %474 = vmatprep.subr.mxu0 0.0
    %475 = vmatpush1.msra.mxu0 0.0
    %476 = vmatprep.subr.mxu0 0.0
    %477 = vmatpush1.msra.mxu0 0.0
    %478 = vmatprep.subr.mxu0 0.0
    %479 = vmatpush1.msra.mxu0 0.0
    %480 = vmatprep.subr.mxu0 0.0
    %481 = vmatpush1.msra.mxu0 0.0
    %482 = vmatprep.subr.mxu0 0.0
    %483 = vmatpush1.msra.mxu0 0.0
    %484 = vmatprep.subr.mxu0 0.0
    %485 = vmatpush1.msra.mxu0 0.0
    %486 = vmatprep.subr.mxu0 0.0
    %487 = vmatpush1.msra.mxu0 0.0
    %488 = vmatprep.subr.mxu0 0.0
    %489 = vmatpush1.msra.mxu0 0.0
    %490 = vmatprep.subr.mxu0 0.0
    %491 = vmatpush1.msra.mxu0 0.0
    %492 = vmatprep.subr.mxu0 0.0
    %493 = vmatpush1.msra.mxu0 0.0
    %494 = vmatprep.subr.mxu0 0.0
    %495 = vmatpush1.msra.mxu0 0.0
    %496 = vmatprep.subr.mxu0 0.0
    %497 = vmatpush1.msra.mxu0 0.0
    %498 = vmatprep.subr.mxu0 0.0
    %499 = vmatpush1.msra.mxu0 0.0
    %500 = vmatprep.mubr.f32.mxu0 0.0
    %501 = vmatmul.mubr.f32.gmra.mrb[0].mxu0 %v413
    %v502 = vpop.f32.mrb[0].mxu0
    %v503 = vadd.f32 0.0, %v502
    %v504 = vpop.f32.mrb[0].mxu0
    %505 = vmatprep.mubr.f32.mxu0 0.0
    %506 = vmatmul.mubr.f32.gmra.mrb[0].mxu0 %v416
    %v507 = vpop.f32.mrb[0].mxu0
    %v508 = vadd.f32 0.0, %v507
    %v509 = vpop.f32.mrb[0].mxu0
    %510 = vmatprep.mubr.f32.mxu0 0.0
    %511 = vmatmul.mubr.f32.gmra.mrb[0].mxu0 %v419
    %v512 = vpop.f32.mrb[0].mxu0
    %v513 = vadd.f32 0.0, %v512
    %v514 = vpop.f32.mrb[0].mxu0
    %515 = vmatprep.mubr.f32.mxu0 0.0
    %516 = vmatmul.mubr.f32.gmra.mrb[0].mxu0 %v422
    %v517 = vpop.f32.mrb[0].mxu0
    %v518 = vadd.f32 0.0, %v517
    %v519 = vpop.f32.mrb[0].mxu0
    %520 = vmatprep.mubr.f32.mxu0 0.0
    %521 = vmatmul.mubr.f32.gmra.mrb[0].mxu0 %v425
    %v522 = vpop.f32.mrb[0].mxu0
    %v523 = vadd.f32 0.0, %v522
    %v524 = vpop.f32.mrb[0].mxu0
    %525 = vmatprep.mubr.f32.mxu0 0.0
    %526 = vmatmul.mubr.f32.gmra.mrb[0].mxu0 %v428
    %v527 = vpop.f32.mrb[0].mxu0
    %v528 = vadd.f32 0.0, %v527
    %v529 = vpop.f32.mrb[0].mxu0
    %530 = vmatprep.mubr.f32.mxu0 0.0
    %531 = vmatmul.mubr.f32.gmra.mrb[0].mxu0 %v431
    %v532 = vpop.f32.mrb[0].mxu0
    %v533 = vadd.f32 0.0, %v532
    %v534 = vpop.f32.mrb[0].mxu0
    %535 = vmatprep.mubr.f32.mxu0 0.0
    %536 = vmatmul.mubr.f32.gmra.mrb[0].mxu0 %v434
    %v537 = vpop.f32.mrb[0].mxu0
    %v538 = vadd.f32 0.0, %v537
    %v539 = vpop.f32.mrb[0].mxu0
    %540 = vdwg.mxu0
    %541 = vmatprep.subr.mxu0 0.0
    %542 = vmatpush1.msra.mxu0 %v399
    %543 = vmatprep.subr.mxu0 0.0
    %544 = vmatpush1.msra.mxu0 %v400
    %545 = vmatprep.subr.mxu0 0.0
    %546 = vmatpush1.msra.mxu0 %v401
    %547 = vmatprep.subr.mxu0 0.0
    %548 = vmatpush1.msra.mxu0 %v402
    %549 = vmatprep.subr.mxu0 0.0
    %550 = vmatpush1.msra.mxu0 0.0
    %551 = vmatprep.subr.mxu0 0.0
    %552 = vmatpush1.msra.mxu0 0.0
    %553 = vmatprep.subr.mxu0 0.0
    %554 = vmatpush1.msra.mxu0 0.0
    %555 = vmatprep.subr.mxu0 0.0
    %556 = vmatpush1.msra.mxu0 0.0
    %557 = vmatprep.subr.mxu0 0.0
    %558 = vmatpush1.msra.mxu0 0.0
    %559 = vmatprep.subr.mxu0 0.0
    %560 = vmatpush1.msra.mxu0 0.0
    %561 = vmatprep.subr.mxu0 0.0
    %562 = vmatpush1.msra.mxu0 0.0
    %563 = vmatprep.subr.mxu0 0.0
    %564 = vmatpush1.msra.mxu0 0.0
    %565 = vmatprep.subr.mxu0 0.0
    %566 = vmatpush1.msra.mxu0 0.0
    %567 = vmatprep.subr.mxu0 0.0
    %568 = vmatpush1.msra.mxu0 0.0
    %569 = vmatprep.subr.mxu0 0.0
    %570 = vmatpush1.msra.mxu0 0.0
    %571 = vmatprep.subr.mxu0 0.0
    %572 = vmatpush1.msra.mxu0 0.0
    %573 = vmatprep.subr.mxu0 0.0
    %574 = vmatpush1.msra.mxu0 0.0
    %575 = vmatprep.subr.mxu0 0.0
    %576 = vmatpush1.msra.mxu0 0.0
    %577 = vmatprep.subr.mxu0 0.0
    %578 = vmatpush1.msra.mxu0 0.0
    %579 = vmatprep.subr.mxu0 0.0
    %580 = vmatpush1.msra.mxu0 0.0
    %581 = vmatprep.subr.mxu0 0.0
    %582 = vmatpush1.msra.mxu0 0.0
    %583 = vmatprep.subr.mxu0 0.0
    %584 = vmatpush1.msra.mxu0 0.0
    %585 = vmatprep.subr.mxu0 0.0
    %586 = vmatpush1.msra.mxu0 0.0
    %587 = vmatprep.subr.mxu0 0.0
    %588 = vmatpush1.msra.mxu0 0.0
    %589 = vmatprep.subr.mxu0 0.0
    %590 = vmatpush1.msra.mxu0 0.0
    %591 = vmatprep.subr.mxu0 0.0
    %592 = vmatpush1.msra.mxu0 0.0
    %593 = vmatprep.subr.mxu0 0.0
    %594 = vmatpush1.msra.mxu0 0.0
    %595 = vmatprep.subr.mxu0 0.0
    %596 = vmatpush1.msra.mxu0 0.0
    %597 = vmatprep.subr.mxu0 0.0
    %598 = vmatpush1.msra.mxu0 0.0
    %599 = vmatprep.subr.mxu0 0.0
    %600 = vmatpush1.msra.mxu0 0.0
    %601 = vmatprep.subr.mxu0 0.0
    %602 = vmatpush1.msra.mxu0 0.0
    %603 = vmatprep.subr.mxu0 0.0
    %604 = vmatpush1.msra.mxu0 0.0
    %605 = vmatprep.mubr.f32.mxu0 0.0
    %606 = vmatmul.mubr.f32.gmra.mrb[0].mxu0 %v413
    %v607 = vpop.f32.mrb[0].mxu0
    %v608 = vadd.f32 0.0, %v607
    %v609 = vpop.f32.mrb[0].mxu0
    %610 = vmatprep.mubr.f32.mxu0 0.0
    %611 = vmatmul.mubr.f32.gmra.mrb[0].mxu0 %v416
    %v612 = vpop.f32.mrb[0].mxu0
    %v613 = vadd.f32 0.0, %v612
    %v614 = vpop.f32.mrb[0].mxu0
    %615 = vmatprep.mubr.f32.mxu0 0.0
    %616 = vmatmul.mubr.f32.gmra.mrb[0].mxu0 %v419
    %v617 = vpop.f32.mrb[0].mxu0
    %v618 = vadd.f32 0.0, %v617
    %v619 = vpop.f32.mrb[0].mxu0
    %620 = vmatprep.mubr.f32.mxu0 0.0
    %621 = vmatmul.mubr.f32.gmra.mrb[0].mxu0 %v422
    %v622 = vpop.f32.mrb[0].mxu0
    %v623 = vadd.f32 0.0, %v622
    %v624 = vpop.f32.mrb[0].mxu0
    %625 = vmatprep.mubr.f32.mxu0 0.0
    %626 = vmatmul.mubr.f32.gmra.mrb[0].mxu0 %v425
    %v627 = vpop.f32.mrb[0].mxu0
    %v628 = vadd.f32 0.0, %v627
    %v629 = vpop.f32.mrb[0].mxu0
    %630 = vmatprep.mubr.f32.mxu0 0.0
    %631 = vmatmul.mubr.f32.gmra.mrb[0].mxu0 %v428
    %v632 = vpop.f32.mrb[0].mxu0
    %v633 = vadd.f32 0.0, %v632
    %v634 = vpop.f32.mrb[0].mxu0
    %635 = vmatprep.mubr.f32.mxu0 0.0
    %636 = vmatmul.mubr.f32.gmra.mrb[0].mxu0 %v431
    %v637 = vpop.f32.mrb[0].mxu0
    %v638 = vadd.f32 0.0, %v637
    %v639 = vpop.f32.mrb[0].mxu0
    %640 = vmatprep.mubr.f32.mxu0 0.0
    %641 = vmatmul.mubr.f32.gmra.mrb[0].mxu0 %v434
    %v642 = vpop.f32.mrb[0].mxu0
    %v643 = vadd.f32 0.0, %v642
    %v644 = vpop.f32.mrb[0].mxu0
    %645 = vdwg.mxu0
    %646 = vadd.xlane.f32.xlu0 %v503
    %v647 = vpop.xlane.xlu0 %646
    %648 = vadd.xlane.f32.xlu0 %v508
    %v649 = vpop.xlane.xlu0 %648
    %650 = vadd.xlane.f32.xlu0 %v513
    %v651 = vpop.xlane.xlu0 %650
    %652 = vadd.xlane.f32.xlu0 %v518
    %v653 = vpop.xlane.xlu0 %652
    %654 = vadd.xlane.f32.xlu0 %v523
    %v655 = vpop.xlane.xlu0 %654
    %656 = vadd.xlane.f32.xlu0 %v528
    %v657 = vpop.xlane.xlu0 %656
    %658 = vadd.xlane.f32.xlu0 %v533
    %v659 = vpop.xlane.xlu0 %658
    %660 = vadd.xlane.f32.xlu0 %v538
    %v661 = vpop.xlane.xlu0 %660
    %v662 = vadd.f32 %v647, 0.0
    %v663 = vadd.f32 %v649, 0.0
    %v664 = vadd.f32 %v651, 0.0
    %v665 = vadd.f32 %v653, 0.0
    %v666 = vadd.f32 %v655, 0.0
    %v667 = vadd.f32 %v657, 0.0
    %v668 = vadd.f32 %v659, 0.0
    %v669 = vadd.f32 %v661, 0.0
    %670 = vadd.xlane.f32.xlu0 %v608
    %v671 = vpop.xlane.xlu0 %670
    %672 = vadd.xlane.f32.xlu0 %v613
    %v673 = vpop.xlane.xlu0 %672
    %674 = vadd.xlane.f32.xlu0 %v618
    %v675 = vpop.xlane.xlu0 %674
    %676 = vadd.xlane.f32.xlu0 %v623
    %v677 = vpop.xlane.xlu0 %676
    %678 = vadd.xlane.f32.xlu0 %v628
    %v679 = vpop.xlane.xlu0 %678
    %680 = vadd.xlane.f32.xlu0 %v633
    %v681 = vpop.xlane.xlu0 %680
    %682 = vadd.xlane.f32.xlu0 %v638
    %v683 = vpop.xlane.xlu0 %682
    %684 = vadd.xlane.f32.xlu0 %v643
    %v685 = vpop.xlane.xlu0 %684
    %v686 = vadd.f32 %v662, %v671
    %v687 = vadd.f32 %v663, %v673
    %v688 = vadd.f32 %v664, %v675
    %v689 = vadd.f32 %v665, %v677
    %v690 = vadd.f32 %v666, %v679
    %v691 = vadd.f32 %v667, %v681
    %v692 = vadd.f32 %v668, %v683
    %v693 = vadd.f32 %v669, %v685
    %v694 = vmul.f32 %v503, %v503
    %v695 = vmul.f32 %v508, %v508
    %v696 = vmul.f32 %v513, %v513
    %v697 = vmul.f32 %v518, %v518
    %v698 = vmul.f32 %v523, %v523
    %v699 = vmul.f32 %v528, %v528
    %v700 = vmul.f32 %v533, %v533
    %v701 = vmul.f32 %v538, %v538
    %702 = vadd.xlane.f32.xlu0 %v694
    %v703 = vpop.xlane.xlu0 %702
    %704 = vadd.xlane.f32.xlu0 %v695
    %v705 = vpop.xlane.xlu0 %704
    %706 = vadd.xlane.f32.xlu0 %v696
    %v707 = vpop.xlane.xlu0 %706
    %708 = vadd.xlane.f32.xlu0 %v697
    %v709 = vpop.xlane.xlu0 %708
    %710 = vadd.xlane.f32.xlu0 %v698
    %v711 = vpop.xlane.xlu0 %710
    %712 = vadd.xlane.f32.xlu0 %v699
    %v713 = vpop.xlane.xlu0 %712
    %714 = vadd.xlane.f32.xlu0 %v700
    %v715 = vpop.xlane.xlu0 %714
    %716 = vadd.xlane.f32.xlu0 %v701
    %v717 = vpop.xlane.xlu0 %716
    %v718 = vadd.f32 %v703, 0.0
    %v719 = vadd.f32 %v705, 0.0
    %v720 = vadd.f32 %v707, 0.0
    %v721 = vadd.f32 %v709, 0.0
    %v722 = vadd.f32 %v711, 0.0
    %v723 = vadd.f32 %v713, 0.0
    %v724 = vadd.f32 %v715, 0.0
    %v725 = vadd.f32 %v717, 0.0
    %v726 = vmul.f32 %v608, %v608
    %v727 = vmul.f32 %v613, %v613
    %v728 = vmul.f32 %v618, %v618
    %v729 = vmul.f32 %v623, %v623
    %v730 = vmul.f32 %v628, %v628
    %v731 = vmul.f32 %v633, %v633
    %v732 = vmul.f32 %v638, %v638
    %v733 = vmul.f32 %v643, %v643
    %734 = vadd.xlane.f32.xlu0 %v726
    %v735 = vpop.xlane.xlu0 %734
    %736 = vadd.xlane.f32.xlu0 %v727
    %v737 = vpop.xlane.xlu0 %736
    %738 = vadd.xlane.f32.xlu0 %v728
    %v739 = vpop.xlane.xlu0 %738
    %740 = vadd.xlane.f32.xlu0 %v729
    %v741 = vpop.xlane.xlu0 %740
    %742 = vadd.xlane.f32.xlu0 %v730
    %v743 = vpop.xlane.xlu0 %742
    %744 = vadd.xlane.f32.xlu0 %v731
    %v745 = vpop.xlane.xlu0 %744
    %746 = vadd.xlane.f32.xlu0 %v732
    %v747 = vpop.xlane.xlu0 %746
    %748 = vadd.xlane.f32.xlu0 %v733
    %v749 = vpop.xlane.xlu0 %748
    %v750 = vadd.f32 %v718, %v735
    %v751 = vadd.f32 %v719, %v737
    %v752 = vadd.f32 %v720, %v739
    %v753 = vadd.f32 %v721, %v741
    %v754 = vadd.f32 %v722, %v743
    %v755 = vadd.f32 %v723, %v745
    %v756 = vadd.f32 %v724, %v747
    %v757 = vadd.f32 %v725, %v749
    %v758 = vmul.f32 %v686, 0.03125
    %v759 = vmul.f32 %v687, 0.03125
    %v760 = vmul.f32 %v688, 0.03125
    %v761 = vmul.f32 %v689, 0.03125
    %v762 = vmul.f32 %v690, 0.03125
    %v763 = vmul.f32 %v691, 0.03125
    %v764 = vmul.f32 %v692, 0.03125
    %v765 = vmul.f32 %v693, 0.03125
    %v766 = vmul.f32 %v750, 0.03125
    %v767 = vmul.f32 %v751, 0.03125
    %v768 = vmul.f32 %v752, 0.03125
    %v769 = vmul.f32 %v753, 0.03125
    %v770 = vmul.f32 %v754, 0.03125
    %v771 = vmul.f32 %v755, 0.03125
    %v772 = vmul.f32 %v756, 0.03125
    %v773 = vmul.f32 %v757, 0.03125
    %v774 = vmul.f32 %v758, %v758
    %v775 = vmul.f32 %v759, %v759
    %v776 = vmul.f32 %v760, %v760
    %v777 = vmul.f32 %v761, %v761
    %v778 = vmul.f32 %v762, %v762
    %v779 = vmul.f32 %v763, %v763
    %v780 = vmul.f32 %v764, %v764
    %v781 = vmul.f32 %v765, %v765
    %v782 = vsub.f32 %v766, %v774
    %v783 = vsub.f32 %v767, %v775
    %v784 = vsub.f32 %v768, %v776
    %v785 = vsub.f32 %v769, %v777
    %v786 = vsub.f32 %v770, %v778
    %v787 = vsub.f32 %v771, %v779
    %v788 = vsub.f32 %v772, %v780
    %v789 = vsub.f32 %v773, %v781
    %v790 = vmax.f32 %v782, 0.0
    %v791 = vmax.f32 %v783, 0.0
    %v792 = vmax.f32 %v784, 0.0
    %v793 = vmax.f32 %v785, 0.0
    %v794 = vmax.f32 %v786, 0.0
    %v795 = vmax.f32 %v787, 0.0
    %v796 = vmax.f32 %v788, 0.0
    %v797 = vmax.f32 %v789, 0.0
    %v798 = vld [vmem:[%s5] sm:$0xff]
    %v799 = vld [vmem:[%s5 + $0x8] sm:$0xff]
    %v800 = vld [vmem:[%s5 + $0x10] sm:$0xff]
    %v801 = vld [vmem:[%s5 + $0x18] sm:$0xff]
    %v802 = vld [vmem:[%s5 + $0x20] sm:$0xff]
    %v803 = vld [vmem:[%s5 + $0x28] sm:$0xff]
    %v804 = vld [vmem:[%s5 + $0x30] sm:$0xff]
    %v805 = vld [vmem:[%s5 + $0x38] sm:$0xff]
    %v806 = vadd.f32 %v790, 1e-05
    %v807 = vadd.f32 %v791, 1e-05
    %v808 = vadd.f32 %v792, 1e-05
    %v809 = vadd.f32 %v793, 1e-05
    %v810 = vadd.f32 %v794, 1e-05
    %v811 = vadd.f32 %v795, 1e-05
    %v812 = vadd.f32 %v796, 1e-05
    %v813 = vadd.f32 %v797, 1e-05
    %v814 = vrsqrt.pop %v806
    %v815 = vrsqrt.pop %v807
    %v816 = vrsqrt.pop %v808
    %v817 = vrsqrt.pop %v809
    %v818 = vrsqrt.pop %v810
    %v819 = vrsqrt.pop %v811
    %v820 = vrsqrt.pop %v812
    %v821 = vrsqrt.pop %v813
    %v822 = vmul.f32 %v798, %v814
    %v823 = vmul.f32 %v799, %v815
    %v824 = vmul.f32 %v800, %v816
    %v825 = vmul.f32 %v801, %v817
    %v826 = vmul.f32 %v802, %v818
    %v827 = vmul.f32 %v803, %v819
    %v828 = vmul.f32 %v804, %v820
    %v829 = vmul.f32 %v805, %v821
    %v830 = vld [vmem:[%s6] sm:$0xff]
    %v831 = vld [vmem:[%s6 + $0x8] sm:$0xff]
    %v832 = vld [vmem:[%s6 + $0x10] sm:$0xff]
    %v833 = vld [vmem:[%s6 + $0x18] sm:$0xff]
    %v834 = vld [vmem:[%s6 + $0x20] sm:$0xff]
    %v835 = vld [vmem:[%s6 + $0x28] sm:$0xff]
    %v836 = vld [vmem:[%s6 + $0x30] sm:$0xff]
    %v837 = vld [vmem:[%s6 + $0x38] sm:$0xff]
    %v838 = vmul.f32 %v758, %v822
    %v839 = vmul.f32 %v759, %v823
    %v840 = vmul.f32 %v760, %v824
    %v841 = vmul.f32 %v761, %v825
    %v842 = vmul.f32 %v762, %v826
    %v843 = vmul.f32 %v763, %v827
    %v844 = vmul.f32 %v764, %v828
    %v845 = vmul.f32 %v765, %v829
    %v846 = vsub.f32 %v830, %v838
    %v847 = vsub.f32 %v831, %v839
    %v848 = vsub.f32 %v832, %v840
    %v849 = vsub.f32 %v833, %v841
    %v850 = vsub.f32 %v834, %v842
    %v851 = vsub.f32 %v835, %v843
    %v852 = vsub.f32 %v836, %v844
    %v853 = vsub.f32 %v837, %v845
    %855 = vset.pattern.permute.xlu0 0
    %856 = vperm.xlu0 %855, %v822
    %v857 = vpop.permute.xlu0 %856
    %860 = vset.pattern.permute.xlu0 0
    %861 = vperm.xlu0 %860, %v823
    %v862 = vpop.permute.xlu0 %861
    %865 = vset.pattern.permute.xlu0 0
    %866 = vperm.xlu0 %865, %v824
    %v867 = vpop.permute.xlu0 %866
    %870 = vset.pattern.permute.xlu0 0
    %871 = vperm.xlu0 %870, %v825
    %v872 = vpop.permute.xlu0 %871
    %875 = vset.pattern.permute.xlu0 0
    %876 = vperm.xlu0 %875, %v826
    %v877 = vpop.permute.xlu0 %876
    %880 = vset.pattern.permute.xlu0 0
    %881 = vperm.xlu0 %880, %v827
    %v882 = vpop.permute.xlu0 %881
    %885 = vset.pattern.permute.xlu0 0
    %886 = vperm.xlu0 %885, %v828
    %v887 = vpop.permute.xlu0 %886
    %890 = vset.pattern.permute.xlu0 0
    %891 = vperm.xlu0 %890, %v829
    %v892 = vpop.permute.xlu0 %891
    %v894 = vmul.f32 %v503, %v857
    %v895 = vmul.f32 %v508, %v862
    %v896 = vmul.f32 %v513, %v867
    %v897 = vmul.f32 %v518, %v872
    %v898 = vmul.f32 %v523, %v877
    %v899 = vmul.f32 %v528, %v882
    %v900 = vmul.f32 %v533, %v887
    %v901 = vmul.f32 %v538, %v892
    %903 = vset.pattern.permute.xlu0 0
    %904 = vperm.xlu0 %903, %v846
    %v905 = vpop.permute.xlu0 %904
    %908 = vset.pattern.permute.xlu0 0
    %909 = vperm.xlu0 %908, %v847
    %v910 = vpop.permute.xlu0 %909
    %913 = vset.pattern.permute.xlu0 0
    %914 = vperm.xlu0 %913, %v848
    %v915 = vpop.permute.xlu0 %914
    %918 = vset.pattern.permute.xlu0 0
    %919 = vperm.xlu0 %918, %v849
    %v920 = vpop.permute.xlu0 %919
    %923 = vset.pattern.permute.xlu0 0
    %924 = vperm.xlu0 %923, %v850
    %v925 = vpop.permute.xlu0 %924
    %928 = vset.pattern.permute.xlu0 0
    %929 = vperm.xlu0 %928, %v851
    %v930 = vpop.permute.xlu0 %929
    %933 = vset.pattern.permute.xlu0 0
    %934 = vperm.xlu0 %933, %v852
    %v935 = vpop.permute.xlu0 %934
    %938 = vset.pattern.permute.xlu0 0
    %939 = vperm.xlu0 %938, %v853
    %v940 = vpop.permute.xlu0 %939
    %v942 = vadd.f32 %v894, %v905
    %v943 = vadd.f32 %v895, %v910
    %v944 = vadd.f32 %v896, %v915
    %v945 = vadd.f32 %v897, %v920
    %v946 = vadd.f32 %v898, %v925
    %v947 = vadd.f32 %v899, %v930
    %v948 = vadd.f32 %v900, %v935
    %v949 = vadd.f32 %v901, %v940
    %v950 = vmax.f32 %v942, 0.0
    %v951 = vmax.f32 %v943, 0.0
    %v952 = vmax.f32 %v944, 0.0
    %v953 = vmax.f32 %v945, 0.0
    %v954 = vmax.f32 %v946, 0.0
    %v955 = vmax.f32 %v947, 0.0
    %v956 = vmax.f32 %v948, 0.0
    %v957 = vmax.f32 %v949, 0.0
    %958 = vst [vmem:[#allocation2] sm:$0xff] %v950
    %959 = vst [vmem:[#allocation2 + $0x8] sm:$0xff] %v951
    %960 = vst [vmem:[#allocation2 + $0x10] sm:$0xff] %v952
    %961 = vst [vmem:[#allocation2 + $0x18] sm:$0xff] %v953
    %962 = vst [vmem:[#allocation2 + $0x20] sm:$0xff] %v954
    %963 = vst [vmem:[#allocation2 + $0x28] sm:$0xff] %v955
    %964 = vst [vmem:[#allocation2 + $0x30] sm:$0xff] %v956
    %965 = vst [vmem:[#allocation2 + $0x38] sm:$0xff] %v957
    %v966 = vmul.f32 %v608, %v857
    %v967 = vmul.f32 %v613, %v862
    %v968 = vmul.f32 %v618, %v867
    %v969 = vmul.f32 %v623, %v872
    %v970 = vmul.f32 %v628, %v877
    %v971 = vmul.f32 %v633, %v882
    %v972 = vmul.f32 %v638, %v887
    %v973 = vmul.f32 %v643, %v892
    %v974 = vadd.f32 %v966, %v905
    %v975 = vadd.f32 %v967, %v910
    %v976 = vadd.f32 %v968, %v915
    %v977 = vadd.f32 %v969, %v920
    %v978 = vadd.f32 %v970, %v925
    %v979 = vadd.f32 %v971, %v930
    %v980 = vadd.f32 %v972, %v935
    %v981 = vadd.f32 %v973, %v940
    %v982 = vmax.f32 %v974, 0.0
    %v983 = vmax.f32 %v975, 0.0
    %v984 = vmax.f32 %v976, 0.0
    %v985 = vmax.f32 %v977, 0.0
    %v986 = vmax.f32 %v978, 0.0
    %v987 = vmax.f32 %v979, 0.0
    %v988 = vmax.f32 %v980, 0.0
    %v989 = vmax.f32 %v981, 0.0
    %s990 = scalar_lea.vmem [#allocation2], 64
    %991 = vst [vmem:[%s990] sm:$0xff] %v982
    %992 = vst [vmem:[%s990 + $0x8] sm:$0xff] %v983
    %993 = vst [vmem:[%s990 + $0x10] sm:$0xff] %v984
    %994 = vst [vmem:[%s990 + $0x18] sm:$0xff] %v985
    %995 = vst [vmem:[%s990 + $0x20] sm:$0xff] %v986
    %996 = vst [vmem:[%s990 + $0x28] sm:$0xff] %v987
    %997 = vst [vmem:[%s990 + $0x30] sm:$0xff] %v988
    %998 = vst [vmem:[%s990 + $0x38] sm:$0xff] %v989
    // Predicated region
    $region30: #{tpu_custom_call.1} parent=1 // pred_check
      _
    $region31: #{tpu_custom_call.1} parent=1 // pred_check_branch
      %1000 = sbr.rel (0) target = $region33
    $region32: #{tpu_custom_call.1} parent=1 // pred_region
      %s1002 = ssub.s32 2048, 2048
      %1003 = vsyncadd [#allocation3], %s1002
      %s1004 = sshll.u32 [#allocation2], 4
      %s1005 = int_to_ptr.vmem [resolvable:$true] %s1004
      %1010 = dma.vmem_to_hbm [thread:$0]  %s1005, 2048, %s7, [#allocation3], 128, 128, 8
    $region33: #{tpu_custom_call.1} parent=1 // pred_fallthru
      _
    // Predicated region
    $region34: #{tpu_custom_call.1} parent=1 // pred_check
      _
    $region35: #{tpu_custom_call.1} parent=1 // pred_check_branch
      %1012 = sbr.rel (0) target = $region37
    $region36: #{tpu_custom_call.1} parent=1 // pred_region
      %1013 = dma.done [#allocation3], 2048
    $region37: #{tpu_custom_call.1} parent=1 // pred_fallthru
      _
    %1014 = vsyncpa [#allocation3], 1

</llo_original>
